<compile_context>
chip_gen: v5e
topology: v5e:2x2
jax: 0.10.0
libtpu: 0.0.40
codegen_flags: <defaults>
</compile_context>

<pallas_src>
import functools
import math

import jax
import jax.numpy as jnp
from jax.experimental import pallas as pl
from jax.experimental.pallas import tpu as pltpu

_LANE = 128      # TPU lane width (last dim alignment)
_SUBLANE = 8     # TPU sublane width (second-to-last dim alignment, f32)
_NEG_INF = -1e30


def _round_up(n, m):
    return ((n + m - 1) // m) * m


def _ffnn_kernel(num_regularized_layers, x_ref, *refs):
    """Fused MLP + log_softmax over one batch tile.

    refs = (w_0, b_0, w_1, b_1, ..., w_L, b_L, out_ref)
    Weights are bf16 (in_pad, out_pad); biases are f32 (1, out_pad).  The first
    `num_regularized_layers` pairs are followed by ReLU (dropout == identity at
    inference); the final pair is the output Linear whose padded class columns
    carry a -1e30 bias so log_softmax ignores them.
    """
    out_ref = refs[-1]
    param_refs = refs[:-1]

    h = x_ref[...]  # bf16 (TB, in_pad)

    # Regularized layers: Linear -> ReLU (-> Dropout == identity)
    for layer in range(num_regularized_layers):
        w = param_refs[2 * layer][...]            # bf16
        b = param_refs[2 * layer + 1][...]        # f32 (1, out_pad)
        z = jnp.dot(h, w, preferred_element_type=jnp.float32) + b
        h = jnp.maximum(z, 0.0).astype(jnp.bfloat16)

    # Output layer: Linear (no activation)
    w_out = param_refs[-2][...]
    b_out = param_refs[-1][...]
    z = jnp.dot(h, w_out, preferred_element_type=jnp.float32) + b_out

    # log_softmax along the class dimension (padded columns are ~ -1e30 so
    # exp() underflows to exactly 0 for them).  All math in f32.
    z_max = jnp.max(z, axis=1, keepdims=True)
    z_shift = z - z_max
    lse = jnp.log(jnp.sum(jnp.exp(z_shift), axis=1, keepdims=True))
    out_ref[...] = (z_shift - lse).astype(out_ref.dtype)


def prepare_params(params):
    """One-time param prep: pad feature dims to 128 lanes, cast W -> bf16.

    params: list of (W, b) with W shaped (in_features, out_features) — i.e. the
            transpose of PyTorch nn.Linear.weight — and b shaped (out_features,).
    Returns list of (W_padded_bf16, b_padded_f32 shaped (1, out_pad)).  The
    final layer's padded class-bias entries are set to -1e30 to mask them out
    of the in-kernel log_softmax.
    """
    prepared = []
    n_layers = len(params)
    for idx, (w, b) in enumerate(params):
        in_dim, out_dim = w.shape
        in_pad = _round_up(in_dim, _LANE)
        out_pad = _round_up(out_dim, _LANE)
        w_p = jnp.pad(w.astype(jnp.float32),
                      ((0, in_pad - in_dim), (0, out_pad - out_dim)))
        fill = _NEG_INF if idx == n_layers - 1 else 0.0
        b_p = jnp.pad(b.astype(jnp.float32).reshape(1, -1),
                      ((0, 0), (0, out_pad - out_dim)),
                      constant_values=fill)
        prepared.append((w_p.astype(jnp.bfloat16), b_p))
    return prepared


def ffnn_classifier_forward(x, prepared_params, *, num_classes, block_batch=256):
    """Run the fused FFNN classifier kernel.

    x:               (batch, *feature_dims)  -- flattened to (batch, input_dim).
    prepared_params: output of prepare_params().
    Returns log-probabilities of shape (batch, num_classes), float32.
    """
    batch = x.shape[0]
    x2d = x.reshape(batch, -1)
    in_dim = x2d.shape[1]

    in_pad = prepared_params[0][0].shape[0]
    out_pad = prepared_params[-1][0].shape[1]

    # Batch tile: as large as requested (256 suits v6e/v7x MXU), sublane
    # aligned; pad the batch up to a whole number of tiles.
    tb = min(block_batch, _round_up(batch, _SUBLANE))
    batch_pad = _round_up(batch, tb)

    x_p = jnp.pad(x2d.astype(jnp.bfloat16),
                  ((0, batch_pad - batch), (0, in_pad - in_dim)))

    flat_args = [x_p]
    in_specs = [pl.BlockSpec((tb, in_pad), lambda i: (i, 0))]
    for w, b in prepared_params:
        flat_args.append(w)
        in_specs.append(pl.BlockSpec(w.shape, lambda i: (0, 0)))  # resident
        flat_args.append(b)
        in_specs.append(pl.BlockSpec(b.shape, lambda i: (0, 0)))  # resident

    kernel = functools.partial(_ffnn_kernel, len(prepared_params) - 1)

    out = pl.pallas_call(
        kernel,
        out_shape=jax.ShapeDtypeStruct((batch_pad, out_pad), jnp.float32),
        grid=(batch_pad // tb,),
        in_specs=in_specs,
        out_specs=pl.BlockSpec((tb, out_pad), lambda i: (i, 0)),
        compiler_params=pltpu.CompilerParams(
            dimension_semantics=("parallel",)),
    )(*flat_args)

    return out[:batch, :num_classes]


def make_params(key, input_dim, hidden_dim, num_hidden_layers, num_classes):
    """Deterministic PyTorch-style (kaiming-uniform-ish) Linear init."""
    dims = [input_dim] + [hidden_dim] * (num_hidden_layers + 1) + [num_classes]
    params = []
    for i in range(len(dims) - 1):
        fan_in, fan_out = dims[i], dims[i + 1]
        key, kw, kb = jax.random.split(key, 3)
        bound = 1.0 / math.sqrt(fan_in)
        w = jax.random.uniform(kw, (fan_in, fan_out), jnp.float32, -bound, bound)
        b = jax.random.uniform(kb, (fan_out,), jnp.float32, -bound, bound)
        params.append((w, b))
    return params


def _reference_forward(x, params):
    """Pure-JAX f32 reference (eval-mode module semantics)."""
    h = x.reshape(x.shape[0], -1).astype(jnp.float32)
    for w, b in params[:-1]:
        h = jnp.maximum(h @ w + b, 0.0)
    z = h @ params[-1][0] + params[-1][1]
    return jax.nn.log_softmax(z, axis=1)


if __name__ == "__main__":
    # Module config: input_dim = 4*4*4 = 64 (flattened), hidden_dim=32,
    # num_hidden_layers=1, num_classes=8.
    batch = 8
    input_shape = (batch, 4, 4, 4)
    input_dim = 4 * 4 * 4
    hidden_dim = 32
    num_hidden_layers = 1
    num_classes = 8

    key = jax.random.PRNGKey(0)
    key, kx = jax.random.split(key)
    x = jax.random.normal(kx, input_shape, jnp.float32)

    params = make_params(key, input_dim, hidden_dim, num_hidden_layers,
                         num_classes)
    prepared = prepare_params(params)  # one-time pad/cast, hoisted out of fwd

    fwd = jax.jit(functools.partial(ffnn_classifier_forward,
                                    num_classes=num_classes,
                                    block_batch=256))
    logits = fwd(x, prepared)
    jax.block_until_ready(logits)

    # Sanity: shape, rows exponentiate-sum to 1, and match the f32 reference
    # (loose tolerance: bf16 matmul inputs).
    assert logits.shape == (batch, num_classes)
    row_sums = jnp.sum(jnp.exp(logits), axis=1)
    assert bool(jnp.allclose(row_sums, 1.0, atol=1e-3))
    ref = _reference_forward(x, params)
    assert bool(jnp.allclose(logits, ref, atol=1e-1, rtol=1e-1))

    print("KERNEL_OK")
</pallas_src>

<mosaic_0001>
module attributes {stable_mosaic.version = 11 : i64} {
  func.func @_ffnn_kernel(%arg0: i32, %arg1: memref<8x128xbf16, #tpu.memory_space<vmem>>, %arg2: memref<128x128xbf16, #tpu.memory_space<vmem>>, %arg3: memref<1x128xf32, #tpu.memory_space<vmem>>, %arg4: memref<128x128xbf16, #tpu.memory_space<vmem>>, %arg5: memref<1x128xf32, #tpu.memory_space<vmem>>, %arg6: memref<128x128xbf16, #tpu.memory_space<vmem>>, %arg7: memref<1x128xf32, #tpu.memory_space<vmem>>, %arg8: memref<8x128xf32, #tpu.memory_space<vmem>>) attributes {dimension_semantics = [#tpu.dimension_semantics<parallel>], iteration_bounds = array<i64: 1>, scalar_prefetch = 0 : i64, scratch_operands = 0 : i64, tpu.core_type = #tpu.core_type<tc>, window_params = [{transform_indices = @transform_0, window_bounds = array<i64: 8, 128>}, {pipeline_mode = #tpu.pipeline_mode<synchronous>, transform_indices = @transform_1, window_bounds = array<i64: 128, 128>}, {pipeline_mode = #tpu.pipeline_mode<synchronous>, transform_indices = @transform_2, window_bounds = array<i64: 1, 128>}, {pipeline_mode = #tpu.pipeline_mode<synchronous>, transform_indices = @transform_3, window_bounds = array<i64: 128, 128>}, {pipeline_mode = #tpu.pipeline_mode<synchronous>, transform_indices = @transform_4, window_bounds = array<i64: 1, 128>}, {pipeline_mode = #tpu.pipeline_mode<synchronous>, transform_indices = @transform_5, window_bounds = array<i64: 128, 128>}, {pipeline_mode = #tpu.pipeline_mode<synchronous>, transform_indices = @transform_6, window_bounds = array<i64: 1, 128>}, {transform_indices = @transform_7, window_bounds = array<i64: 8, 128>}]} {
    %c0 = arith.constant 0 : index
    %c0_0 = arith.constant 0 : index
    %0 = vector.load %arg1[%c0, %c0_0] : memref<8x128xbf16, #tpu.memory_space<vmem>>, vector<8x128xbf16>
    %c0_1 = arith.constant 0 : index
    %c0_2 = arith.constant 0 : index
    %1 = vector.load %arg2[%c0_1, %c0_2] : memref<128x128xbf16, #tpu.memory_space<vmem>>, vector<128x128xbf16>
    %c0_3 = arith.constant 0 : index
    %c0_4 = arith.constant 0 : index
    %2 = vector.load %arg3[%c0_3, %c0_4] : memref<1x128xf32, #tpu.memory_space<vmem>>, vector<1x128xf32>
    %cst = arith.constant dense<0.000000e+00> : vector<8x128xf32>
    %3 = tpu.matmul %0, %1, %cst {dimension_numbers = #tpu.dot_dimension_numbers<[1], [0], [0], [1], [0, 0, 1, 1], [], []>} : vector<8x128xbf16>, vector<128x128xbf16>, vector<8x128xf32> -> vector<8x128xf32>
    %4 = vector.broadcast %2 : vector<1x128xf32> to vector<8x128xf32>
    %5 = arith.addf %3, %4 : vector<8x128xf32>
    %cst_5 = arith.constant 0.000000e+00 : f32
    %6 = vector.broadcast %cst_5 : f32 to vector<8x128xf32>
    %7 = arith.maximumf %5, %6 : vector<8x128xf32>
    %8 = arith.truncf %7 : vector<8x128xf32> to vector<8x128xbf16>
    %c0_6 = arith.constant 0 : index
    %c0_7 = arith.constant 0 : index
    %9 = vector.load %arg4[%c0_6, %c0_7] : memref<128x128xbf16, #tpu.memory_space<vmem>>, vector<128x128xbf16>
    %c0_8 = arith.constant 0 : index
    %c0_9 = arith.constant 0 : index
    %10 = vector.load %arg5[%c0_8, %c0_9] : memref<1x128xf32, #tpu.memory_space<vmem>>, vector<1x128xf32>
    %cst_10 = arith.constant dense<0.000000e+00> : vector<8x128xf32>
    %11 = tpu.matmul %8, %9, %cst_10 {dimension_numbers = #tpu.dot_dimension_numbers<[1], [0], [0], [1], [0, 0, 1, 1], [], []>} : vector<8x128xbf16>, vector<128x128xbf16>, vector<8x128xf32> -> vector<8x128xf32>
    %12 = vector.broadcast %10 : vector<1x128xf32> to vector<8x128xf32>
    %13 = arith.addf %11, %12 : vector<8x128xf32>
    %cst_11 = arith.constant 0.000000e+00 : f32
    %14 = vector.broadcast %cst_11 : f32 to vector<8x128xf32>
    %15 = arith.maximumf %13, %14 : vector<8x128xf32>
    %16 = arith.truncf %15 : vector<8x128xf32> to vector<8x128xbf16>
    %c0_12 = arith.constant 0 : index
    %c0_13 = arith.constant 0 : index
    %17 = vector.load %arg6[%c0_12, %c0_13] : memref<128x128xbf16, #tpu.memory_space<vmem>>, vector<128x128xbf16>
    %c0_14 = arith.constant 0 : index
    %c0_15 = arith.constant 0 : index
    %18 = vector.load %arg7[%c0_14, %c0_15] : memref<1x128xf32, #tpu.memory_space<vmem>>, vector<1x128xf32>
    %cst_16 = arith.constant dense<0.000000e+00> : vector<8x128xf32>
    %19 = tpu.matmul %16, %17, %cst_16 {dimension_numbers = #tpu.dot_dimension_numbers<[1], [0], [0], [1], [0, 0, 1, 1], [], []>} : vector<8x128xbf16>, vector<128x128xbf16>, vector<8x128xf32> -> vector<8x128xf32>
    %20 = vector.broadcast %18 : vector<1x128xf32> to vector<8x128xf32>
    %21 = arith.addf %19, %20 : vector<8x128xf32>
    %cst_17 = arith.constant dense<0xFF800000> : vector<8xf32>
    %22 = vector.multi_reduction <maximumf>, %21, %cst_17 [1] : vector<8x128xf32> to vector<8xf32>
    %23 = vector.shape_cast %22 : vector<8xf32> to vector<8x1xf32>
    %24 = vector.broadcast %23 : vector<8x1xf32> to vector<8x128xf32>
    %25 = arith.subf %21, %24 : vector<8x128xf32>
    %26 = math.exp %25 : vector<8x128xf32>
    %cst_18 = arith.constant dense<0.000000e+00> : vector<8xf32>
    %27 = vector.multi_reduction <add>, %26, %cst_18 [1] : vector<8x128xf32> to vector<8xf32>
    %28 = vector.shape_cast %27 : vector<8xf32> to vector<8x1xf32>
    %29 = math.log %28 : vector<8x1xf32>
    %30 = vector.broadcast %29 : vector<8x1xf32> to vector<8x128xf32>
    %31 = arith.subf %25, %30 : vector<8x128xf32>
    %c0_19 = arith.constant 0 : index
    %c0_20 = arith.constant 0 : index
    %32 = vector.load %arg8[%c0_19, %c0_20] : memref<8x128xf32, #tpu.memory_space<vmem>>, vector<8x128xf32>
    tpu.vector_store %arg8[%c0_19, %c0_20], %31 {strides = array<i32>} : memref<8x128xf32, #tpu.memory_space<vmem>>, vector<8x128xf32>,
    return
  }
  func.func @transform_0(%arg0: i32) -> (i32, i32) {
    %c0_i32 = arith.constant 0 : i32
    %c0_i32_0 = arith.constant 0 : i32
    return %arg0, %c0_i32 : i32, i32
  }
  func.func @transform_1(%arg0: i32) -> (i32, i32) {
    %c0_i32 = arith.constant 0 : i32
    %c0_i32_0 = arith.constant 0 : i32
    %c0_i32_1 = arith.constant 0 : i32
    return %c0_i32, %c0_i32_0 : i32, i32
  }
  func.func @transform_2(%arg0: i32) -> (i32, i32) {
    %c0_i32 = arith.constant 0 : i32
    %c0_i32_0 = arith.constant 0 : i32
    %c0_i32_1 = arith.constant 0 : i32
    return %c0_i32, %c0_i32_0 : i32, i32
  }
  func.func @transform_3(%arg0: i32) -> (i32, i32) {
    %c0_i32 = arith.constant 0 : i32
    %c0_i32_0 = arith.constant 0 : i32
    %c0_i32_1 = arith.constant 0 : i32
    return %c0_i32, %c0_i32_0 : i32, i32
  }
  func.func @transform_4(%arg0: i32) -> (i32, i32) {
    %c0_i32 = arith.constant 0 : i32
    %c0_i32_0 = arith.constant 0 : i32
    %c0_i32_1 = arith.constant 0 : i32
    return %c0_i32, %c0_i32_0 : i32, i32
  }
  func.func @transform_5(%arg0: i32) -> (i32, i32) {
    %c0_i32 = arith.constant 0 : i32
    %c0_i32_0 = arith.constant 0 : i32
    %c0_i32_1 = arith.constant 0 : i32
    return %c0_i32, %c0_i32_0 : i32, i32
  }
  func.func @transform_6(%arg0: i32) -> (i32, i32) {
    %c0_i32 = arith.constant 0 : i32
    %c0_i32_0 = arith.constant 0 : i32
    %c0_i32_1 = arith.constant 0 : i32
    return %c0_i32, %c0_i32_0 : i32, i32
  }
  func.func @transform_7(%arg0: i32) -> (i32, i32) {
    %c0_i32 = arith.constant 0 : i32
    %c0_i32_0 = arith.constant 0 : i32
    return %arg0, %c0_i32 : i32, i32
  }
}

</mosaic_0001>

<llo_original>
// kernel: ffnn_classifier_forward.1
$region0: #{ffnn_classifier_forward.1}
  #allocation0 [shape = 'u32[]', space=smem, size = 0x4, offset = 0x4, fixed_abs, tag = 'smem constant byte address 0x4 - core index']
  #allocation1 [shape = 'u32[72,128]{1,0:T(1,128)}', space=vmem, size = 0x9000, scoped, tag = 'internal scratch']
  %s0 = inlined_call_operand.vmem [shape: bf16[8,128], index: 0, kind: input, shape index: {}]
  %s1 = inlined_call_operand.vmem [shape: bf16[128,128], index: 1, kind: input, shape index: {}]
  %s2 = inlined_call_operand.vmem [shape: f32[1,128], index: 2, kind: input, shape index: {}]
  %s3 = inlined_call_operand.vmem [shape: bf16[128,128], index: 3, kind: input, shape index: {}]
  %s4 = inlined_call_operand.vmem [shape: f32[1,128], index: 4, kind: input, shape index: {}]
  %s5 = inlined_call_operand.hbm [shape: bf16[128,128], index: 5, kind: input, shape index: {}]
  %s6 = inlined_call_operand.vmem [shape: f32[1,128], index: 6, kind: input, shape index: {}]
  %s7 = inlined_call_operand.hbm [shape: f32[8,128], index: 7, kind: output, shape index: {}]
  %s8 = sld [smem:[#allocation0]]
  $region42: #{ffnn_classifier_forward.1} parent=0
    _
  %s10 = ssub.s32 1, %s8
  %s11 = scalar_select 0, %s10, %s8
  $region1: #{ffnn_classifier_forward.1} parent=0
    #allocation2 [shape = 'u8[32768]{0}', space=vmem, size = 0x8000, scoped, tag = 'input window, operand 5, single buffered']
    #allocation3 [shape = 's32[1]{0}', space=sflag, size = 0x4, scoped, tag = 'scoped memory for ffnn_classifier_forward.1']
    #allocation4 [shape = 's32[1]{0}', space=sflag, size = 0x4, scoped, tag = 'scoped memory for ffnn_classifier_forward.1']
    #allocation5 [shape = 'u8[4096]{0}', space=vmem, size = 0x1000, scoped, tag = 'output window, operand 0, single buffered']
    %12 = vsyncpa [#allocation3], 0
    %13 = vsyncpa [#allocation4], 0
    // Predicated region
    $region2: #{ffnn_classifier_forward.1} parent=1 // pred_check
      _
    $region3: #{ffnn_classifier_forward.1} parent=1 // pred_check_branch
      %15 = sbr.rel (0) target = $region5
    $region4: #{ffnn_classifier_forward.1} parent=1 // pred_region
      _
    $region5: #{ffnn_classifier_forward.1} parent=1 // pred_fallthru
      _
    // Predicated region
    $region6: #{ffnn_classifier_forward.1} parent=1 // pred_check
      _
    $region7: #{ffnn_classifier_forward.1} parent=1 // pred_check_branch
      %17 = sbr.rel (0) target = $region9
    $region8: #{ffnn_classifier_forward.1} parent=1 // pred_region
      _
    $region9: #{ffnn_classifier_forward.1} parent=1 // pred_fallthru
      _
    // Predicated region
    $region10: #{ffnn_classifier_forward.1} parent=1 // pred_check
      _
    $region11: #{ffnn_classifier_forward.1} parent=1 // pred_check_branch
      %19 = sbr.rel (0) target = $region13
    $region12: #{ffnn_classifier_forward.1} parent=1 // pred_region
      _
    $region13: #{ffnn_classifier_forward.1} parent=1 // pred_fallthru
      _
    // Predicated region
    $region14: #{ffnn_classifier_forward.1} parent=1 // pred_check
      _
    $region15: #{ffnn_classifier_forward.1} parent=1 // pred_check_branch
      %21 = sbr.rel (0) target = $region17
    $region16: #{ffnn_classifier_forward.1} parent=1 // pred_region
      _
    $region17: #{ffnn_classifier_forward.1} parent=1 // pred_fallthru
      _
    // Predicated region
    $region18: #{ffnn_classifier_forward.1} parent=1 // pred_check
      _
    $region19: #{ffnn_classifier_forward.1} parent=1 // pred_check_branch
      %23 = sbr.rel (0) target = $region21
    $region20: #{ffnn_classifier_forward.1} parent=1 // pred_region
      _
    $region21: #{ffnn_classifier_forward.1} parent=1 // pred_fallthru
      _
    // Predicated region
    $region22: #{ffnn_classifier_forward.1} parent=1 // pred_check
      _
    $region23: #{ffnn_classifier_forward.1} parent=1 // pred_check_branch
      %25 = sbr.rel (0) target = $region25
    $region24: #{ffnn_classifier_forward.1} parent=1 // pred_region
      %27 = vsyncadd [#allocation3], 0
      %s28 = sshll.u32 %s5, 4
      %s29 = int_to_ptr.hbm [resolvable:$true] %s28
      %s30 = sshll.u32 [#allocation2], 4
      %s31 = int_to_ptr.vmem [resolvable:$true] %s30
      %36 = dma.hbm_to_vmem [thread:$0]  %s29, 1024, %s31, [#allocation3], 64, 64, 4
    $region25: #{ffnn_classifier_forward.1} parent=1 // pred_fallthru
      _
    // Predicated region
    $region26: #{ffnn_classifier_forward.1} parent=1 // pred_check
      _
    $region27: #{ffnn_classifier_forward.1} parent=1 // pred_check_branch
      %38 = sbr.rel (0) target = $region29
    $region28: #{ffnn_classifier_forward.1} parent=1 // pred_region
      _
    $region29: #{ffnn_classifier_forward.1} parent=1 // pred_fallthru
      _
    // Predicated region
    $region30: #{ffnn_classifier_forward.1} parent=1 // pred_check
      _
    $region31: #{ffnn_classifier_forward.1} parent=1 // pred_check_branch
      %40 = sbr.rel (0) target = $region33
    $region32: #{ffnn_classifier_forward.1} parent=1 // pred_region
      %42 = dma.done [#allocation3], 1024
    $region33: #{ffnn_classifier_forward.1} parent=1 // pred_fallthru
      _
    %v43 = vld [vmem:[%s0] sm:$0xf]
    %v44 = vld [vmem:[%s1] sm:$0xf]
    %v45 = vld [vmem:[%s1 + $0x4] sm:$0xf]
    %v46 = vld [vmem:[%s1 + $0x8] sm:$0xf]
    %v47 = vld [vmem:[%s1 + $0xc] sm:$0xf]
    %v48 = vld [vmem:[%s1 + $0x10] sm:$0xf]
    %v49 = vld [vmem:[%s1 + $0x14] sm:$0xf]
    %v50 = vld [vmem:[%s1 + $0x18] sm:$0xf]
    %v51 = vld [vmem:[%s1 + $0x1c] sm:$0xf]
    %v52 = vld [vmem:[%s1 + $0x20] sm:$0xf]
    %v53 = vld [vmem:[%s1 + $0x24] sm:$0xf]
    %v54 = vld [vmem:[%s1 + $0x28] sm:$0xf]
    %v55 = vld [vmem:[%s1 + $0x2c] sm:$0xf]
    %v56 = vld [vmem:[%s1 + $0x30] sm:$0xf]
    %v57 = vld [vmem:[%s1 + $0x34] sm:$0xf]
    %v58 = vld [vmem:[%s1 + $0x38] sm:$0xf]
    %v59 = vld [vmem:[%s1 + $0x3c] sm:$0xf]
    %v60 = vld [vmem:[%s2] sm:$0x1]
    %v62 = vperm.slane %v60, 0
    %v80 = vunpack.c.l.b16 %v44
    %v81 = vunpack.c.l.b16 %v45
    %v82 = vunpack.c.l.b16 %v46
    %v83 = vunpack.c.l.b16 %v47
    %v84 = vunpack.c.l.b16 %v48
    %v85 = vunpack.c.l.b16 %v49
    %v86 = vunpack.c.l.b16 %v50
    %v87 = vunpack.c.l.b16 %v51
    %v88 = vunpack.c.l.b16 %v52
    %v89 = vunpack.c.l.b16 %v53
    %v90 = vunpack.c.l.b16 %v54
    %v91 = vunpack.c.l.b16 %v55
    %v92 = vunpack.c.l.b16 %v56
    %v93 = vunpack.c.l.b16 %v57
    %v94 = vunpack.c.l.b16 %v58
    %v95 = vunpack.c.l.b16 %v59
    %v96 = vpack.c.b16 %v81, %v80
    %v97 = vpack.c.b16 %v83, %v82
    %v98 = vpack.c.b16 %v85, %v84
    %v99 = vpack.c.b16 %v87, %v86
    %v100 = vpack.c.b16 %v89, %v88
    %v101 = vpack.c.b16 %v91, %v90
    %v102 = vpack.c.b16 %v93, %v92
    %v103 = vpack.c.b16 %v95, %v94
    %112 = vmatpush.bf16.msra.mxu0 %v103
    %113 = vmatpush.bf16.msra.mxu0 %v102
    %114 = vmatpush.bf16.msra.mxu0 %v101
    %115 = vmatpush.bf16.msra.mxu0 %v100
    %116 = vmatpush.bf16.msra.mxu0 %v99
    %117 = vmatpush.bf16.msra.mxu0 %v98
    %118 = vmatpush.bf16.msra.mxu0 %v97
    %119 = vmatpush.bf16.msra.mxu0 %v96
    %120 = vmatmul.bf16.gmra.mxu0 %v43
    %v121 = vpop.f32.mrf.mxu0
    %v122 = vadd.f32 %v62, %v121
    %v123 = vpop.f32.mrf.mxu0
    %124 = vdwg.mxu0
    %v125 = vmax.f32 %v122, 0.0
    %v126 = vpack.c.bf16 %v125, %v125
    %v127 = vld [vmem:[%s3] sm:$0xf]
    %v128 = vld [vmem:[%s3 + $0x4] sm:$0xf]
    %v129 = vld [vmem:[%s3 + $0x8] sm:$0xf]
    %v130 = vld [vmem:[%s3 + $0xc] sm:$0xf]
    %v131 = vld [vmem:[%s3 + $0x10] sm:$0xf]
    %v132 = vld [vmem:[%s3 + $0x14] sm:$0xf]
    %v133 = vld [vmem:[%s3 + $0x18] sm:$0xf]
    %v134 = vld [vmem:[%s3 + $0x1c] sm:$0xf]
    %v135 = vld [vmem:[%s3 + $0x20] sm:$0xf]
    %v136 = vld [vmem:[%s3 + $0x24] sm:$0xf]
    %v137 = vld [vmem:[%s3 + $0x28] sm:$0xf]
    %v138 = vld [vmem:[%s3 + $0x2c] sm:$0xf]
    %v139 = vld [vmem:[%s3 + $0x30] sm:$0xf]
    %v140 = vld [vmem:[%s3 + $0x34] sm:$0xf]
    %v141 = vld [vmem:[%s3 + $0x38] sm:$0xf]
    %v142 = vld [vmem:[%s3 + $0x3c] sm:$0xf]
    %v143 = vld [vmem:[%s4] sm:$0x1]
    %v145 = vperm.slane %v143, 0
    %v163 = vunpack.c.l.b16 %v127
    %v164 = vunpack.c.l.b16 %v128
    %v165 = vunpack.c.l.b16 %v129
    %v166 = vunpack.c.l.b16 %v130
    %v167 = vunpack.c.l.b16 %v131
    %v168 = vunpack.c.l.b16 %v132
    %v169 = vunpack.c.l.b16 %v133
    %v170 = vunpack.c.l.b16 %v134
    %v171 = vunpack.c.l.b16 %v135
    %v172 = vunpack.c.l.b16 %v136
    %v173 = vunpack.c.l.b16 %v137
    %v174 = vunpack.c.l.b16 %v138
    %v175 = vunpack.c.l.b16 %v139
    %v176 = vunpack.c.l.b16 %v140
    %v177 = vunpack.c.l.b16 %v141
    %v178 = vunpack.c.l.b16 %v142
    %v179 = vpack.c.b16 %v164, %v163
    %v180 = vpack.c.b16 %v166, %v165
    %v181 = vpack.c.b16 %v168, %v167
    %v182 = vpack.c.b16 %v170, %v169
    %v183 = vpack.c.b16 %v172, %v171
    %v184 = vpack.c.b16 %v174, %v173
    %v185 = vpack.c.b16 %v176, %v175
    %v186 = vpack.c.b16 %v178, %v177
    %195 = vmatpush.bf16.msra.mxu0 %v186
    %196 = vmatpush.bf16.msra.mxu0 %v185
    %197 = vmatpush.bf16.msra.mxu0 %v184
    %198 = vmatpush.bf16.msra.mxu0 %v183
    %199 = vmatpush.bf16.msra.mxu0 %v182
    %200 = vmatpush.bf16.msra.mxu0 %v181
    %201 = vmatpush.bf16.msra.mxu0 %v180
    %202 = vmatpush.bf16.msra.mxu0 %v179
    %203 = vmatmul.bf16.gmra.mxu0 %v126
    %v204 = vpop.f32.mrf.mxu0
    %v205 = vadd.f32 %v145, %v204
    %v206 = vpop.f32.mrf.mxu0
    %207 = vdwg.mxu0
    %v208 = vmax.f32 %v205, 0.0
    %v209 = vpack.c.bf16 %v208, %v208
    %v210 = vld [vmem:[#allocation2] sm:$0xf]
    %v211 = vld [vmem:[#allocation2 + $0x4] sm:$0xf]
    %v212 = vld [vmem:[#allocation2 + $0x8] sm:$0xf]
    %v213 = vld [vmem:[#allocation2 + $0xc] sm:$0xf]
    %v214 = vld [vmem:[#allocation2 + $0x10] sm:$0xf]
    %v215 = vld [vmem:[#allocation2 + $0x14] sm:$0xf]
    %v216 = vld [vmem:[#allocation2 + $0x18] sm:$0xf]
    %v217 = vld [vmem:[#allocation2 + $0x1c] sm:$0xf]
    %v218 = vld [vmem:[#allocation2 + $0x20] sm:$0xf]
    %v219 = vld [vmem:[#allocation2 + $0x24] sm:$0xf]
    %v220 = vld [vmem:[#allocation2 + $0x28] sm:$0xf]
    %v221 = vld [vmem:[#allocation2 + $0x2c] sm:$0xf]
    %v222 = vld [vmem:[#allocation2 + $0x30] sm:$0xf]
    %v223 = vld [vmem:[#allocation2 + $0x34] sm:$0xf]
    %v224 = vld [vmem:[#allocation2 + $0x38] sm:$0xf]
    %v225 = vld [vmem:[#allocation2 + $0x3c] sm:$0xf]
    %v226 = vld [vmem:[%s6] sm:$0x1]
    %v228 = vperm.slane %v226, 0
    %v246 = vunpack.c.l.b16 %v210
    %v247 = vunpack.c.l.b16 %v211
    %v248 = vunpack.c.l.b16 %v212
    %v249 = vunpack.c.l.b16 %v213
    %v250 = vunpack.c.l.b16 %v214
    %v251 = vunpack.c.l.b16 %v215
    %v252 = vunpack.c.l.b16 %v216
    %v253 = vunpack.c.l.b16 %v217
    %v254 = vunpack.c.l.b16 %v218
    %v255 = vunpack.c.l.b16 %v219
    %v256 = vunpack.c.l.b16 %v220
    %v257 = vunpack.c.l.b16 %v221
    %v258 = vunpack.c.l.b16 %v222
    %v259 = vunpack.c.l.b16 %v223
    %v260 = vunpack.c.l.b16 %v224
    %v261 = vunpack.c.l.b16 %v225
    %v262 = vpack.c.b16 %v247, %v246
    %v263 = vpack.c.b16 %v249, %v248
    %v264 = vpack.c.b16 %v251, %v250
    %v265 = vpack.c.b16 %v253, %v252
    %v266 = vpack.c.b16 %v255, %v254
    %v267 = vpack.c.b16 %v257, %v256
    %v268 = vpack.c.b16 %v259, %v258
    %v269 = vpack.c.b16 %v261, %v260
    %278 = vmatpush.bf16.msra.mxu0 %v269
    %279 = vmatpush.bf16.msra.mxu0 %v268
    %280 = vmatpush.bf16.msra.mxu0 %v267
    %281 = vmatpush.bf16.msra.mxu0 %v266
    %282 = vmatpush.bf16.msra.mxu0 %v265
    %283 = vmatpush.bf16.msra.mxu0 %v264
    %284 = vmatpush.bf16.msra.mxu0 %v263
    %285 = vmatpush.bf16.msra.mxu0 %v262
    %286 = vmatmul.bf16.gmra.mxu0 %v209
    %v287 = vpop.f32.mrf.mxu0
    %v288 = vadd.f32 %v228, %v287
    %v289 = vpop.f32.mrf.mxu0
    %290 = vdwg.mxu0
    %291 = vmax.xlane.f32.xlu0 %v288
    %v292 = vpop.xlane.xlu0 %291
    %v293 = vsub.f32 %v288, %v292
    %v294 = vmul.f32 %v293, 1.442695
    %v295 = vpow.pop %v294
    %296 = vadd.xlane.f32.xlu0 %v295
    %v297 = vpop.xlane.xlu0 %296
    %v298 = vlog2.pop %v297
    %v299 = vmul.f32 %v298, 0.6931472
    %v300 = vsub.f32 %v293, %v299
    %301 = vst [vmem:[#allocation5] sm:$0xff] %v300
    // Predicated region
    $region34: #{ffnn_classifier_forward.1} parent=1 // pred_check
      _
    $region35: #{ffnn_classifier_forward.1} parent=1 // pred_check_branch
      %303 = sbr.rel (0) target = $region37
    $region36: #{ffnn_classifier_forward.1} parent=1 // pred_region
      %305 = vsyncadd [#allocation4], 0
      %s307 = sshll.u32 [#allocation5], 4
      %s308 = int_to_ptr.vmem [resolvable:$true] %s307
      %s309 = sshll.u32 %s7, 4
      %s310 = int_to_ptr.hbm [resolvable:$true] %s309
      %312 = dma.vmem_to_hbm [thread:$0]  %s308, 128, %s310, [#allocation4]
    $region37: #{ffnn_classifier_forward.1} parent=1 // pred_fallthru
      _
    // Predicated region
    $region38: #{ffnn_classifier_forward.1} parent=1 // pred_check
      _
    $region39: #{ffnn_classifier_forward.1} parent=1 // pred_check_branch
      %314 = sbr.rel (0) target = $region41
    $region40: #{ffnn_classifier_forward.1} parent=1 // pred_region
      %316 = dma.done [#allocation4], 128
    $region41: #{ffnn_classifier_forward.1} parent=1 // pred_fallthru
      _
    %317 = vsyncpa [#allocation3], 1
    %318 = vsyncpa [#allocation4], 1

</llo_original>
